<compile_context>
chip_gen: v5e
topology: v5e:2x2
jax: 0.10.0
libtpu: 0.0.40
codegen_flags: <defaults>
</compile_context>

<pallas_src>
import functools
import math

import numpy as np
import jax
import jax.numpy as jnp
from jax.experimental import pallas as pl
from jax.experimental.pallas import tpu as pltpu


COMPUTE_DTYPE = jnp.bfloat16          # inter-kernel activations + weights
VMEM_LIMIT = 48 * 1024 * 1024         # fits v5e/v6e (128 MiB) and v7x (64 MiB) physical VMEM


# ----------------------------------------------------------------------------
# Fused transformer layer kernel (post-norm BERT layer or pre-norm text layer)
# ----------------------------------------------------------------------------

def _fused_layer_kernel(x_ref, bias_ref,
                        qkv_w_ref, qkv_b_ref, o_w_ref, o_b_ref,
                        ln1_g_ref, ln1_b_ref, ln2_g_ref, ln2_b_ref,
                        fc1_w_ref, fc1_b_ref, fc2_w_ref, fc2_b_ref,
                        o_ref, *, num_heads, prenorm, eps):
    x = x_ref[0].astype(jnp.float32)                     # (L, D)
    L, D = x.shape
    Dh = D // num_heads
    scale = 1.0 / math.sqrt(Dh)
    bias = bias_ref[0]                                   # (1, L) additive key-padding bias

    def ln(v, g_ref, b_ref):
        mu = jnp.mean(v, axis=-1, keepdims=True)
        var = jnp.mean(jnp.square(v - mu), axis=-1, keepdims=True)
        return (v - mu) * jax.lax.rsqrt(var + eps) * g_ref[...] + b_ref[...]

    def matmul(a_f32, w_ref, b_ref):
        y = jnp.dot(a_f32.astype(w_ref.dtype), w_ref[...],
                    preferred_element_type=jnp.float32)
        return y + b_ref[...]

    # ---- multi-head self-attention (dropouts = identity at eval) ----
    attn_in = ln(x, ln1_g_ref, ln1_b_ref) if prenorm else x
    qkv = matmul(attn_in, qkv_w_ref, qkv_b_ref)          # (L, 3D) f32

    head_outs = []
    for h in range(num_heads):
        q = qkv[:, h * Dh:(h + 1) * Dh] * scale                      # (L, Dh)
        k = qkv[:, D + h * Dh:D + (h + 1) * Dh]                      # (L, Dh)
        v = qkv[:, 2 * D + h * Dh:2 * D + (h + 1) * Dh]              # (L, Dh)
        s = jax.lax.dot_general(q, k, (((1,), (1,)), ((), ())),
                                preferred_element_type=jnp.float32)  # (L, L)
        s = s + bias
        m = jnp.max(s, axis=-1, keepdims=True)
        e = jnp.exp(s - m)
        p = e * pl.reciprocal(jnp.sum(e, axis=-1, keepdims=True), approx=True)
        head_outs.append(jnp.dot(p, v, preferred_element_type=jnp.float32))
    attn = jnp.concatenate(head_outs, axis=-1)           # (L, D)
    attn = matmul(attn, o_w_ref, o_b_ref)

    if prenorm:
        x1 = x + attn
        ffn_in = ln(x1, ln2_g_ref, ln2_b_ref)
    else:
        x1 = ln(x + attn, ln1_g_ref, ln1_b_ref)
        ffn_in = x1

    # ---- feed-forward (exact-erf GELU, dropouts = identity at eval) ----
    h1 = jax.nn.gelu(matmul(ffn_in, fc1_w_ref, fc1_b_ref), approximate=False)
    h2 = matmul(h1, fc2_w_ref, fc2_b_ref)

    out = (x1 + h2) if prenorm else ln(x1 + h2, ln2_g_ref, ln2_b_ref)
    o_ref[0] = out.astype(o_ref.dtype)


def fused_layer(x_bld, bias_b1l, p, *, num_heads, prenorm, eps):
    B, L, D = x_bld.shape
    F = p["fc1_w"].shape[1]

    def full2d(shape):
        return pl.BlockSpec(shape, lambda b: (0, 0))

    return pl.pallas_call(
        functools.partial(_fused_layer_kernel, num_heads=num_heads,
                          prenorm=prenorm, eps=eps),
        out_shape=jax.ShapeDtypeStruct((B, L, D), COMPUTE_DTYPE),
        grid=(B,),
        in_specs=[
            pl.BlockSpec((1, L, D), lambda b: (b, 0, 0)),
            pl.BlockSpec((1, 1, L), lambda b: (b, 0, 0)),
            full2d((D, 3 * D)), full2d((1, 3 * D)),
            full2d((D, D)), full2d((1, D)),
            full2d((1, D)), full2d((1, D)), full2d((1, D)), full2d((1, D)),
            full2d((D, F)), full2d((1, F)),
            full2d((F, D)), full2d((1, D)),
        ],
        out_specs=pl.BlockSpec((1, L, D), lambda b: (b, 0, 0)),
        compiler_params=pltpu.CompilerParams(
            dimension_semantics=("parallel",),
            vmem_limit_bytes=VMEM_LIMIT,
        ),
    )(x_bld, bias_b1l,
      p["qkv_w"], p["qkv_b"], p["o_w"], p["o_b"],
      p["ln1_g"], p["ln1_b"], p["ln2_g"], p["ln2_b"],
      p["fc1_w"], p["fc1_b"], p["fc2_w"], p["fc2_b"])


# ----------------------------------------------------------------------------
# LayerNorm kernel (embedding LN / final encoder LN)
# ----------------------------------------------------------------------------

def _layernorm_kernel(x_ref, g_ref, b_ref, o_ref, *, eps):
    x = x_ref[...].astype(jnp.float32)                   # (1, L, D)
    mu = jnp.mean(x, axis=-1, keepdims=True)
    var = jnp.mean(jnp.square(x - mu), axis=-1, keepdims=True)
    y = (x - mu) * jax.lax.rsqrt(var + eps)
    o_ref[...] = (y * g_ref[...] + b_ref[...]).astype(o_ref.dtype)


def pallas_layernorm(x_bld, gamma, beta, *, eps, out_dtype):
    B, L, D = x_bld.shape
    return pl.pallas_call(
        functools.partial(_layernorm_kernel, eps=eps),
        out_shape=jax.ShapeDtypeStruct((B, L, D), out_dtype),
        grid=(B,),
        in_specs=[
            pl.BlockSpec((1, L, D), lambda b: (b, 0, 0)),
            pl.BlockSpec((1, D), lambda b: (0, 0)),
            pl.BlockSpec((1, D), lambda b: (0, 0)),
        ],
        out_specs=pl.BlockSpec((1, L, D), lambda b: (b, 0, 0)),
        compiler_params=pltpu.CompilerParams(
            dimension_semantics=("parallel",),
            vmem_limit_bytes=VMEM_LIMIT,
        ),
    )(x_bld, gamma, beta)


# ----------------------------------------------------------------------------
# proj_bert (Linear 768->D + exact GELU) fused with sqrt(D) scale + sincos PE
# ----------------------------------------------------------------------------

def _proj_pe_kernel(x_ref, w_ref, b_ref, pe_ref, o_ref, *, scale):
    x = x_ref[0]                                         # (L, 768) bf16
    y = jnp.dot(x, w_ref[...], preferred_element_type=jnp.float32) + b_ref[...]
    y = jax.nn.gelu(y, approximate=False)                # proj_bert GELU; dropout = identity (eval)
    y = y * scale + pe_ref[0]                            # embed_scale * x + sincos PE
    o_ref[0] = y.astype(o_ref.dtype)


def pallas_proj_pe(x_bld, w, b, pe_1ld, *, scale):
    B, L, K = x_bld.shape
    Dm = w.shape[1]
    return pl.pallas_call(
        functools.partial(_proj_pe_kernel, scale=scale),
        out_shape=jax.ShapeDtypeStruct((B, L, Dm), COMPUTE_DTYPE),
        grid=(B,),
        in_specs=[
            pl.BlockSpec((1, L, K), lambda b_: (b_, 0, 0)),
            pl.BlockSpec((K, Dm), lambda b_: (0, 0)),
            pl.BlockSpec((1, Dm), lambda b_: (0, 0)),
            pl.BlockSpec((1, L, Dm), lambda b_: (0, 0, 0)),
        ],
        out_specs=pl.BlockSpec((1, L, Dm), lambda b_: (b_, 0, 0)),
        compiler_params=pltpu.CompilerParams(
            dimension_semantics=("parallel",),
            vmem_limit_bytes=VMEM_LIMIT,
        ),
    )(x_bld, w, b, pe_1ld)


# ----------------------------------------------------------------------------
# sincos positional encoding (fairseq/MulT style)
# ----------------------------------------------------------------------------

def sinusoid_pe(L, D):
    pos = np.arange(L, dtype=np.float32)[:, None]
    i = np.arange(D, dtype=np.float32)[None, :]
    angle = pos / np.power(10000.0, (2.0 * np.floor(i / 2.0)) / D)
    pe = np.where((np.arange(D)[None, :] % 2) == 0, np.sin(angle), np.cos(angle))
    return jnp.asarray(pe, jnp.float32)


# ----------------------------------------------------------------------------
# Full forward
# ----------------------------------------------------------------------------

def input_unit_linguistic_bert_forward(params, text, text_input_bert, text_mask_bert,
                                       text_ids_bert, text_len):
    del text  # `text` is unused in the reference forward()
    bert_p = params["bert"]
    B, L = text_input_bert.shape

    # --- frozen synthetic BERT encoder ---
    emb = (bert_p["word_emb"][text_input_bert]
           + bert_p["pos_emb"][jnp.arange(L)][None, :, :]
           + bert_p["type_emb"][text_ids_bert])                       # (B, L, 768) gather = glue
    x = pallas_layernorm(emb, bert_p["emb_ln_g"], bert_p["emb_ln_b"],
                         eps=1e-12, out_dtype=COMPUTE_DTYPE)
    key_bias = jnp.where(text_mask_bert > 0, 0.0, -1e9).astype(jnp.float32)[:, None, :]  # (B,1,L)
    for layer in bert_p["layers"]:
        x = fused_layer(x, key_bias, layer, num_heads=bert_p["num_heads"],
                        prenorm=False, eps=1e-12)
    # x == BERT last hidden state (B, L, 768), bf16

    # --- permute(1,0,2) + proj_bert + sqrt(D) scale + sincos PE ---
    # (computed in (B, L, D) layout; the (L, B, D) permute is applied once at the end)
    Dm = params["proj_bert"]["w"].shape[1]
    pe = sinusoid_pe(L, Dm)[None, :, :]                               # (1, L, Dm)
    x = pallas_proj_pe(x, params["proj_bert"]["w"], params["proj_bert"]["b"],
                       pe, scale=math.sqrt(Dm))

    # --- TransformerEncoder_text (pre-norm layers + final LN; eval-mode dropouts) ---
    lengths = text_len.reshape(-1)                                    # robust text_len.squeeze()
    key_bias_t = jnp.where(jnp.arange(L)[None, :] < lengths[:, None],
                           0.0, -1e9).astype(jnp.float32)[:, None, :]  # (B,1,L)
    tp = params["trans"]
    for layer in tp["layers"]:
        x = fused_layer(x, key_bias_t, layer, num_heads=tp["num_heads"],
                        prenorm=True, eps=1e-5)
    x = pallas_layernorm(x, tp["ln_g"], tp["ln_b"], eps=1e-5, out_dtype=jnp.float32)

    return jnp.transpose(x, (1, 0, 2))                                # (L, B, module_dim)


# ----------------------------------------------------------------------------
# Deterministic parameter initialization (bf16 weights, f32 biases / LN params)
# ----------------------------------------------------------------------------

def init_params(seed=0, bert_vocab=100, module_dim=512, layers=2, num_heads=8,
                bert_hidden=768, bert_layers=2, bert_heads=12, bert_ffn=3072,
                max_pos=64, type_vocab=2):
    key = jax.random.PRNGKey(seed)
    keys = iter(jax.random.split(key, 512))

    def nxt():
        return next(keys)

    def xavier_w(fan_in, fan_out):                 # nn.init.xavier_normal_
        std = math.sqrt(2.0 / (fan_in + fan_out))
        return (std * jax.random.normal(nxt(), (fan_in, fan_out), jnp.float32)
                ).astype(COMPUTE_DTYPE)

    def bert_w(fan_in, fan_out):                   # BERT-style N(0, 0.02)
        return (0.02 * jax.random.normal(nxt(), (fan_in, fan_out), jnp.float32)
                ).astype(COMPUTE_DTYPE)

    def zeros_b(n):
        return jnp.zeros((1, n), jnp.float32)

    def ln_pair(d):
        return jnp.ones((1, d), jnp.float32), jnp.zeros((1, d), jnp.float32)

    def make_layer(d, ffn, wfn):
        # fused Q/K/V projection: one (d, 3d) weight (three per-matrix inits concatenated)
        lyr = {
            "qkv_w": jnp.concatenate([wfn(d, d), wfn(d, d), wfn(d, d)], axis=1),
            "qkv_b": zeros_b(3 * d),
            "o_w": wfn(d, d), "o_b": zeros_b(d),
            "fc1_w": wfn(d, ffn), "fc1_b": zeros_b(ffn),
            "fc2_w": wfn(ffn, d), "fc2_b": zeros_b(d),
        }
        lyr["ln1_g"], lyr["ln1_b"] = ln_pair(d)
        lyr["ln2_g"], lyr["ln2_b"] = ln_pair(d)
        return lyr

    # --- synthetic frozen BERT ---
    bert = {
        "word_emb": 0.02 * jax.random.normal(nxt(), (bert_vocab, bert_hidden), jnp.float32),
        "pos_emb": 0.02 * jax.random.normal(nxt(), (max_pos, bert_hidden), jnp.float32),
        "type_emb": 0.02 * jax.random.normal(nxt(), (type_vocab, bert_hidden), jnp.float32),
        "num_heads": bert_heads,
        "layers": [make_layer(bert_hidden, bert_ffn, bert_w) for _ in range(bert_layers)],
    }
    bert["emb_ln_g"], bert["emb_ln_b"] = ln_pair(bert_hidden)

    # --- proj_bert (xavier init per the module's init loop) ---
    proj_bert = {"w": xavier_w(768, module_dim), "b": zeros_b(module_dim)}

    # --- TransformerEncoder_text ---
    trans = {"num_heads": num_heads,
             "layers": [make_layer(module_dim, 4 * module_dim, xavier_w)
                        for _ in range(layers)]}
    trans["ln_g"], trans["ln_b"] = ln_pair(module_dim)

    return {"bert": bert, "proj_bert": proj_bert, "trans": trans}


# ----------------------------------------------------------------------------
# Demo
# ----------------------------------------------------------------------------

if __name__ == "__main__":
    B, L = 2, 8
    vocab_size = 100
    module_dim = 512

    params = init_params(seed=0, bert_vocab=vocab_size, module_dim=module_dim, layers=2)

    key = jax.random.PRNGKey(0)
    k1, k2 = jax.random.split(key, 2)

    text = jax.random.randint(k1, (B, L), 0, vocab_size, dtype=jnp.int32)          # unused in forward
    text_input_bert = jax.random.randint(k2, (B, L), 0, vocab_size, dtype=jnp.int32)
    lengths = jnp.array([L, 5], dtype=jnp.int32)
    text_mask_bert = (jnp.arange(L)[None, :] < lengths[:, None]).astype(jnp.int32)  # (B, L) 1/0 mask
    text_ids_bert = jnp.zeros((B, L), dtype=jnp.int32)                              # token_type_ids
    text_len = lengths.reshape(B, 1)                                                # text_len.squeeze() -> (B,)

    out = input_unit_linguistic_bert_forward(params, text, text_input_bert,
                                             text_mask_bert, text_ids_bert, text_len)
    out = jax.block_until_ready(out)

    assert out.shape == (L, B, module_dim), out.shape
    assert bool(jnp.all(jnp.isfinite(out)))
    print("KERNEL_OK")
</pallas_src>

<mosaic_0001>
module attributes {stable_mosaic.version = 11 : i64} {
  func.func @_layernorm_kernel(%arg0: i32, %arg1: memref<1x8x768xf32, #tpu.memory_space<vmem>>, %arg2: memref<1x768xf32, #tpu.memory_space<vmem>>, %arg3: memref<1x768xf32, #tpu.memory_space<vmem>>, %arg4: memref<1x8x768xbf16, #tpu.memory_space<vmem>>) attributes {dimension_semantics = [#tpu.dimension_semantics<parallel>], iteration_bounds = array<i64: 2>, scalar_prefetch = 0 : i64, scratch_operands = 0 : i64, tpu.core_type = #tpu.core_type<tc>, window_params = [{transform_indices = @transform_0, window_bounds = array<i64: 1, 8, 768>}, {pipeline_mode = #tpu.pipeline_mode<synchronous>, transform_indices = @transform_1, window_bounds = array<i64: 1, 768>}, {pipeline_mode = #tpu.pipeline_mode<synchronous>, transform_indices = @transform_2, window_bounds = array<i64: 1, 768>}, {transform_indices = @transform_3, window_bounds = array<i64: 1, 8, 768>}]} {
    %c0 = arith.constant 0 : index
    %c0_0 = arith.constant 0 : index
    %c0_1 = arith.constant 0 : index
    %0 = vector.load %arg1[%c0, %c0_0, %c0_1] : memref<1x8x768xf32, #tpu.memory_space<vmem>>, vector<1x8x768xf32>
    %cst = arith.constant dense<0.000000e+00> : vector<1x8xf32>
    %1 = vector.multi_reduction <add>, %0, %cst [2] : vector<1x8x768xf32> to vector<1x8xf32>
    %2 = vector.shape_cast %1 : vector<1x8xf32> to vector<1x8x1xf32>
    %cst_2 = arith.constant 7.680000e+02 : f32
    %3 = vector.broadcast %cst_2 : f32 to vector<1x8x1xf32>
    %4 = arith.divf %2, %3 : vector<1x8x1xf32>
    %5 = vector.broadcast %4 : vector<1x8x1xf32> to vector<1x8x768xf32>
    %6 = arith.subf %0, %5 : vector<1x8x768xf32>
    %7 = arith.mulf %6, %6 : vector<1x8x768xf32>
    %cst_3 = arith.constant dense<0.000000e+00> : vector<1x8xf32>
    %8 = vector.multi_reduction <add>, %7, %cst_3 [2] : vector<1x8x768xf32> to vector<1x8xf32>
    %9 = vector.shape_cast %8 : vector<1x8xf32> to vector<1x8x1xf32>
    %cst_4 = arith.constant 7.680000e+02 : f32
    %10 = vector.broadcast %cst_4 : f32 to vector<1x8x1xf32>
    %11 = arith.divf %9, %10 : vector<1x8x1xf32>
    %12 = vector.broadcast %4 : vector<1x8x1xf32> to vector<1x8x768xf32>
    %13 = arith.subf %0, %12 : vector<1x8x768xf32>
    %cst_5 = arith.constant 9.99999996E-13 : f32
    %14 = vector.broadcast %cst_5 : f32 to vector<1x8x1xf32>
    %15 = arith.addf %11, %14 : vector<1x8x1xf32>
    %16 = math.rsqrt %15 : vector<1x8x1xf32>
    %17 = vector.broadcast %16 : vector<1x8x1xf32> to vector<1x8x768xf32>
    %18 = arith.mulf %13, %17 : vector<1x8x768xf32>
    %c0_6 = arith.constant 0 : index
    %c0_7 = arith.constant 0 : index
    %19 = vector.load %arg2[%c0_6, %c0_7] : memref<1x768xf32, #tpu.memory_space<vmem>>, vector<1x768xf32>
    %20 = vector.shape_cast %19 : vector<1x768xf32> to vector<1x1x768xf32>
    %21 = vector.broadcast %20 : vector<1x1x768xf32> to vector<1x8x768xf32>
    %22 = arith.mulf %18, %21 : vector<1x8x768xf32>
    %c0_8 = arith.constant 0 : index
    %c0_9 = arith.constant 0 : index
    %23 = vector.load %arg3[%c0_8, %c0_9] : memref<1x768xf32, #tpu.memory_space<vmem>>, vector<1x768xf32>
    %24 = vector.shape_cast %23 : vector<1x768xf32> to vector<1x1x768xf32>
    %25 = vector.broadcast %24 : vector<1x1x768xf32> to vector<1x8x768xf32>
    %26 = arith.addf %22, %25 : vector<1x8x768xf32>
    %27 = arith.truncf %26 : vector<1x8x768xf32> to vector<1x8x768xbf16>
    %c0_10 = arith.constant 0 : index
    %c0_11 = arith.constant 0 : index
    %c0_12 = arith.constant 0 : index
    %28 = vector.load %arg4[%c0_10, %c0_11, %c0_12] : memref<1x8x768xbf16, #tpu.memory_space<vmem>>, vector<1x8x768xbf16>
    tpu.vector_store %arg4[%c0_10, %c0_11, %c0_12], %27 {strides = array<i32>} : memref<1x8x768xbf16, #tpu.memory_space<vmem>>, vector<1x8x768xbf16>,
    return
  }
  func.func @transform_0(%arg0: i32) -> (i32, i32, i32) {
    %c0_i32 = arith.constant 0 : i32
    %c0_i32_0 = arith.constant 0 : i32
    %c0_i32_1 = arith.constant 0 : i32
    return %arg0, %c0_i32, %c0_i32_0 : i32, i32, i32
  }
  func.func @transform_1(%arg0: i32) -> (i32, i32) {
    %c0_i32 = arith.constant 0 : i32
    %c0_i32_0 = arith.constant 0 : i32
    %c0_i32_1 = arith.constant 0 : i32
    return %c0_i32, %c0_i32_0 : i32, i32
  }
  func.func @transform_2(%arg0: i32) -> (i32, i32) {
    %c0_i32 = arith.constant 0 : i32
    %c0_i32_0 = arith.constant 0 : i32
    %c0_i32_1 = arith.constant 0 : i32
    return %c0_i32, %c0_i32_0 : i32, i32
  }
  func.func @transform_3(%arg0: i32) -> (i32, i32, i32) {
    %c0_i32 = arith.constant 0 : i32
    %c0_i32_0 = arith.constant 0 : i32
    %c0_i32_1 = arith.constant 0 : i32
    return %arg0, %c0_i32, %c0_i32_0 : i32, i32, i32
  }
}

</mosaic_0001>

<llo_original>
// kernel: tpu_custom_call.1
$region0: #{tpu_custom_call.1}
  #allocation0 [shape = 'u32[]', space=smem, size = 0x4, offset = 0x4, fixed_abs, tag = 'smem constant byte address 0x4 - core index']
  #allocation1 [shape = 'u32[72,128]{1,0:T(1,128)}', space=vmem, size = 0x9000, scoped, tag = 'internal scratch']
  %s0 = inlined_call_operand.hbm [shape: f32[2,8,768], index: 0, kind: input, shape index: {}]
  %s1 = inlined_call_operand.hbm [shape: f32[1,768], index: 1, kind: input, shape index: {}]
  %s2 = inlined_call_operand.hbm [shape: f32[1,768], index: 2, kind: input, shape index: {}]
  %s3 = inlined_call_operand.hbm [shape: bf16[2,8,768], index: 3, kind: output, shape index: {}]
  %s4 = sld [smem:[#allocation0]]
  $region57: #{tpu_custom_call.1} parent=0
    _
  %s6 = ssub.s32 1, %s4
  %s7 = scalar_select 0, %s6, %s4
  $region1: #{tpu_custom_call.1} parent=0
    #allocation2 [shape = 'u8[49152]{0}', space=vmem, size = 0xc000, scoped, tag = 'input window, operand 0']
    #allocation3 [shape = 's32[2]{0}', space=sflag, size = 0x8, scoped, tag = 'scoped memory for tpu_custom_call.1']
    #allocation4 [shape = 's32[2]{0}', space=sflag, size = 0x8, scoped, tag = 'scoped memory for tpu_custom_call.1']
    #allocation5 [shape = 'u8[3072]{0}', space=vmem, size = 0xc00, scoped, tag = 'input window, operand 1, single buffered']
    #allocation6 [shape = 's32[1]{0}', space=sflag, size = 0x4, scoped, tag = 'scoped memory for tpu_custom_call.1']
    #allocation7 [shape = 'u8[3072]{0}', space=vmem, size = 0xc00, scoped, tag = 'input window, operand 2, single buffered']
    #allocation8 [shape = 'u8[24576]{0}', space=vmem, size = 0x6000, scoped, tag = 'output window, operand 0']
    %8 = vsyncpa [#allocation3], 0
    %s9 = scalar_lea.sflag [#allocation3], 1
    %10 = vsyncpa %s9, 0
    %11 = vsyncpa [#allocation6], 0
    %12 = vsyncpa [#allocation4], 0
    %s13 = scalar_lea.sflag [#allocation4], 1
    %14 = vsyncpa %s13, 0
    loop: start=0, step=1, limit=4
    $region2: #{tpu_custom_call.1} parent=1 // loop_pre_header
      _
    $region3: #{tpu_custom_call.1} parent=1 // loop_header
      %s16 = sphi 0, %s20
      %p17 = scmp.ge.s32.totalorder %s16, 4
      %s26 = sphi 0, %s28
      %s29 = sphi 0, %s26
      %s30 = sphi 0, %s29
      %s46 = sphi 0, %s30
      %s50 = sphi 0, %s50
      %s52 = sphi 0, %s50
      %s53 = sphi 0, %s52
      %s67 = sphi 0, %s53
      %s71 = sphi 0, %s71
      %s73 = sphi 0, %s71
      %s74 = sphi 0, %s73
      %s88 = sphi 0, %s74
      %s94 = sphi 0, %s96
      %s97 = sphi 0, %s94
      %s98 = sphi 0, %s97
      %s114 = sphi 0, %s98
    $region4: #{tpu_custom_call.1} parent=1 // loop_header_branch
      %19 = sbr.rel (%p17) target = $region8
    $region5: #{tpu_custom_call.1} parent=1 // loop_body
      %s21 = ssub.s32 %s16, 1
      %s22 = ssub.s32 %s16, 2
      %s23 = sadd.s32 %s16, 1
      %s24 = ssub.s32 %s16, %s23
      %p25 = scmp.eq.s32.totalorder %s24, 0
      %s27 = sadd.s32 %s26, 1
      %s28 = scalar_select %p25, %s26, %s27
      %p31 = pneg %p25
      %p32 = scmp.eq.s32.totalorder %s16, 1
      %p33 = por %p31, %p32
      %p34 = scmp.ne.s32.totalorder %s26, %s29
      %p35 = scmp.eq.s32.totalorder %s16, 0
      %p36 = por %p34, %p35
      %p37 = scmp.ne.s32.totalorder %s26, %s29
      %p38 = scmp.eq.s32.totalorder %s21, 1
      %p39 = por %p37, %p38
      %p40 = scmp.ne.s32.totalorder %s29, %s30
      %p41 = scmp.eq.s32.totalorder %s21, 0
      %p42 = por %p40, %p41
      %p43 = scmp.ne.s32.totalorder %s29, %s30
      %p44 = scmp.eq.s32.totalorder %s22, 1
      %p45 = por %p43, %p44
      %p47 = scmp.ne.s32.totalorder %s30, %s46
      %p48 = scmp.eq.s32.totalorder %s22, 0
      %p49 = por %p47, %p48
      %s51 = sadd.s32 %s50, 1
      %p54 = scmp.eq.s32.totalorder %s16, 1
      %p55 = scmp.ne.s32.totalorder %s50, %s52
      %p56 = scmp.eq.s32.totalorder %s16, 0
      %p57 = por %p55, %p56
      %p58 = scmp.ne.s32.totalorder %s50, %s52
      %p59 = scmp.eq.s32.totalorder %s21, 1
      %p60 = por %p58, %p59
      %p61 = scmp.ne.s32.totalorder %s52, %s53
      %p62 = scmp.eq.s32.totalorder %s21, 0
      %p63 = por %p61, %p62
      %p64 = scmp.ne.s32.totalorder %s52, %s53
      %p65 = scmp.eq.s32.totalorder %s22, 1
      %p66 = por %p64, %p65
      %p68 = scmp.ne.s32.totalorder %s53, %s67
      %p69 = scmp.eq.s32.totalorder %s22, 0
      %p70 = por %p68, %p69
      %s72 = sadd.s32 %s71, 1
      %p75 = scmp.eq.s32.totalorder %s16, 1
      %p76 = scmp.ne.s32.totalorder %s71, %s73
      %p77 = scmp.eq.s32.totalorder %s16, 0
      %p78 = por %p76, %p77
      %p79 = scmp.ne.s32.totalorder %s71, %s73
      %p80 = scmp.eq.s32.totalorder %s21, 1
      %p81 = por %p79, %p80
      %p82 = scmp.ne.s32.totalorder %s73, %s74
      %p83 = scmp.eq.s32.totalorder %s21, 0
      %p84 = por %p82, %p83
      %p85 = scmp.ne.s32.totalorder %s73, %s74
      %p86 = scmp.eq.s32.totalorder %s22, 1
      %p87 = por %p85, %p86
      %p89 = scmp.ne.s32.totalorder %s74, %s88
      %p90 = scmp.eq.s32.totalorder %s22, 0
      %p91 = por %p89, %p90
      %s92 = ssub.s32 %s16, %s23
      %p93 = scmp.eq.s32.totalorder %s92, 0
      %s95 = sadd.s32 %s94, 1
      %s96 = scalar_select %p93, %s94, %s95
      %p99 = pneg %p93
      %p100 = scmp.eq.s32.totalorder %s16, 1
      %p101 = por %p99, %p100
      %p102 = scmp.ne.s32.totalorder %s94, %s97
      %p103 = scmp.eq.s32.totalorder %s16, 0
      %p104 = por %p102, %p103
      %p105 = scmp.ne.s32.totalorder %s94, %s97
      %p106 = scmp.eq.s32.totalorder %s21, 1
      %p107 = por %p105, %p106
      %p108 = scmp.ne.s32.totalorder %s97, %s98
      %p109 = scmp.eq.s32.totalorder %s21, 0
      %p110 = por %p108, %p109
      %p111 = scmp.ne.s32.totalorder %s97, %s98
      %p112 = scmp.eq.s32.totalorder %s22, 1
      %p113 = por %p111, %p112
      %p115 = scmp.ne.s32.totalorder %s98, %s114
      %p116 = scmp.eq.s32.totalorder %s22, 0
      %p117 = por %p115, %p116
      %p118 = scmp.le.s32.totalorder 1, %s16
      %p119 = scmp.lt.s32.totalorder %s16, 3
      %p120 = pnand %p118, %p119
      %p121 = pneg %p120
      // Predicated region
      $region9: #{tpu_custom_call.1} parent=5 // pred_check
        _
      $region10: #{tpu_custom_call.1} parent=5 // pred_check_branch
        %123 = sbr.rel (%p120) target = $region12
      $region11: #{tpu_custom_call.1} parent=5 // pred_region
        %s124 = ssub.s32 %s16, 1
        // Predicated region
        $region13: #{tpu_custom_call.1} parent=11 // pred_check
          %p125 = pneg %p63
        $region14: #{tpu_custom_call.1} parent=11 // pred_check_branch
          %127 = sbr.rel (%p125) target = $region16
        $region15: #{tpu_custom_call.1} parent=11 // pred_region
          %129 = vsyncadd [#allocation6], 0
          %s131 = sshll.u32 %s1, 4
          %s132 = int_to_ptr.hbm [resolvable:$true] %s131
          %s133 = sshll.u32 [#allocation5], 4
          %s134 = int_to_ptr.vmem [resolvable:$true] %s133
          %136 = dma.hbm_to_vmem [thread:$0]  %s132, 96, %s134, [#allocation6]
        $region16: #{tpu_custom_call.1} parent=11 // pred_fallthru
          _
        // Predicated region
        $region17: #{tpu_custom_call.1} parent=11 // pred_check
          %p137 = pneg %p84
        $region18: #{tpu_custom_call.1} parent=11 // pred_check_branch
          %139 = sbr.rel (%p137) target = $region20
        $region19: #{tpu_custom_call.1} parent=11 // pred_region
          %141 = vsyncadd [#allocation6], 0
          %s143 = sshll.u32 %s2, 4
          %s144 = int_to_ptr.hbm [resolvable:$true] %s143
          %s145 = sshll.u32 [#allocation7], 4
          %s146 = int_to_ptr.vmem [resolvable:$true] %s145
          %148 = dma.hbm_to_vmem [thread:$0]  %s144, 96, %s146, [#allocation6]
        $region20: #{tpu_custom_call.1} parent=11 // pred_fallthru
          _
      $region12: #{tpu_custom_call.1} parent=5 // pred_fallthru
        _
      %p149 = scmp.lt.s32.totalorder %s16, 2
      // Predicated region
      $region21: #{tpu_custom_call.1} parent=5 // pred_check
        %p150 = pneg %p149
      $region22: #{tpu_custom_call.1} parent=5 // pred_check_branch
        %152 = sbr.rel (%p150) target = $region24
      $region23: #{tpu_custom_call.1} parent=5 // pred_region
        // Predicated region
        $region25: #{tpu_custom_call.1} parent=23 // pred_check
          %p153 = pneg %p36
        $region26: #{tpu_custom_call.1} parent=23 // pred_check_branch
          %155 = sbr.rel (%p153) target = $region28
        $region27: #{tpu_custom_call.1} parent=23 // pred_region
          %s156 = sand.u32 %s26, 1
          %s157 = scalar_lea.sflag [#allocation3], %s156
          %s158 = sand.u32 %s26, 1
          %s159 = smul.addr %s158, 48
          %s160 = scalar_lea.vmem [#allocation2], %s159
          %162 = vsyncadd %s157, 0
          %s163 = smul.addr %s16, 6
          %s164 = smul.addr %s163, 8
          %s165 = scalar_lea.hbm %s0, %s164
          %s167 = sshll.u32 %s165, 4
          %s168 = int_to_ptr.hbm [resolvable:$true] %s167
          %s169 = sshll.u32 %s160, 4
          %s170 = int_to_ptr.vmem [resolvable:$true] %s169
          %172 = dma.hbm_to_vmem [thread:$0]  %s168, 768, %s170, %s157
        $region28: #{tpu_custom_call.1} parent=23 // pred_fallthru
          _
      $region24: #{tpu_custom_call.1} parent=5 // pred_fallthru
        _
      %p173 = scmp.le.s32.totalorder 1, %s16
      %p174 = scmp.lt.s32.totalorder %s16, 3
      %p175 = pnand %p173, %p174
      %p176 = pneg %p175
      // Predicated region
      $region29: #{tpu_custom_call.1} parent=5 // pred_check
        _
      $region30: #{tpu_custom_call.1} parent=5 // pred_check_branch
        %178 = sbr.rel (%p175) target = $region32
      $region31: #{tpu_custom_call.1} parent=5 // pred_region
        %s179 = ssub.s32 %s16, 1
        %s180 = sand.u32 %s29, 1
        %s181 = scalar_lea.sflag [#allocation3], %s180
        %s182 = sand.u32 %s29, 1
        %s183 = smul.addr %s182, 48
        %s184 = scalar_lea.vmem [#allocation2], %s183
        // Predicated region
        $region33: #{tpu_custom_call.1} parent=31 // pred_check
          %p185 = pneg %p42
        $region34: #{tpu_custom_call.1} parent=31 // pred_check_branch
          %187 = sbr.rel (%p185) target = $region36
        $region35: #{tpu_custom_call.1} parent=31 // pred_region
          %189 = dma.done %s181, 768
        $region36: #{tpu_custom_call.1} parent=31 // pred_fallthru
          _
        // Predicated region
        $region37: #{tpu_custom_call.1} parent=31 // pred_check
          %p190 = pneg %p63
        $region38: #{tpu_custom_call.1} parent=31 // pred_check_branch
          %192 = sbr.rel (%p190) target = $region40
        $region39: #{tpu_custom_call.1} parent=31 // pred_region
          %194 = dma.done [#allocation6], 96
        $region40: #{tpu_custom_call.1} parent=31 // pred_fallthru
          _
        // Predicated region
        $region41: #{tpu_custom_call.1} parent=31 // pred_check
          %p195 = pneg %p84
        $region42: #{tpu_custom_call.1} parent=31 // pred_check_branch
          %197 = sbr.rel (%p195) target = $region44
        $region43: #{tpu_custom_call.1} parent=31 // pred_region
          %199 = dma.done [#allocation6], 96
        $region44: #{tpu_custom_call.1} parent=31 // pred_fallthru
          _
        %s200 = sand.u32 %s29, 1
        %s201 = scalar_lea.sflag [#allocation3], %s200
        %s202 = sand.u32 %s29, 1
        %s203 = smul.addr %s202, 48
        %s204 = scalar_lea.vmem [#allocation2], %s203
        %p205 = pneg %p42
        %p206 = pneg %p39
        %p207 = pneg %p63
        %p208 = pneg %p60
        %p209 = pneg %p84
        %p210 = pneg %p81
        %p211 = pneg %p110
        %p212 = pneg %p107
        %s213 = sand.u32 %s97, 1
        %s214 = scalar_lea.sflag [#allocation4], %s213
        %s215 = sand.u32 %s97, 1
        %s216 = smul.addr %s215, 24
        %s217 = scalar_lea.vmem [#allocation8], %s216
        %v218 = vld [vmem:[%s184] sm:$0xff]
        %v219 = vld [vmem:[%s184 + $0x8] sm:$0xff]
        %v220 = vld [vmem:[%s184 + $0x10] sm:$0xff]
        %v221 = vld [vmem:[%s184 + $0x18] sm:$0xff]
        %v222 = vld [vmem:[%s184 + $0x20] sm:$0xff]
        %v223 = vld [vmem:[%s184 + $0x28] sm:$0xff]
        %v224 = vadd.f32 %v218, %v219
        %v225 = vadd.f32 %v224, %v220
        %v226 = vadd.f32 %v225, %v221
        %v227 = vadd.f32 %v226, %v222
        %v228 = vadd.f32 %v227, %v223
        %229 = vadd.xlane.f32.xlu0 %v228
        %v230 = vpop.xlane.xlu0 %229
        %v231 = vrcp.pop 768.0
        %v232 = vmul.f32 768.0, %v231
        %v233 = vsub.f32 1.0, %v232
        %v234 = vmul.f32 %v231, %v233
        %v235 = vadd.f32 %v231, %v234
        %vm236 = vweird.f32 %v231
        %v237 = vsel %vm236, %v231, %v235
        %v238 = vmul.f32 %v230, %v237
        %v239 = vsub.f32 %v218, %v238
        %v240 = vsub.f32 %v219, %v238
        %v241 = vsub.f32 %v220, %v238
        %v242 = vsub.f32 %v221, %v238
        %v243 = vsub.f32 %v222, %v238
        %v244 = vsub.f32 %v223, %v238
        %v245 = vmul.f32 %v239, %v239
        %v246 = vmul.f32 %v240, %v240
        %v247 = vmul.f32 %v241, %v241
        %v248 = vmul.f32 %v242, %v242
        %v249 = vmul.f32 %v243, %v243
        %v250 = vmul.f32 %v244, %v244
        %v251 = vadd.f32 %v245, %v246
        %v252 = vadd.f32 %v251, %v247
        %v253 = vadd.f32 %v252, %v248
        %v254 = vadd.f32 %v253, %v249
        %v255 = vadd.f32 %v254, %v250
        %256 = vadd.xlane.f32.xlu0 %v255
        %v257 = vpop.xlane.xlu0 %256
        %v258 = vmul.f32 %v257, %v237
        %v259 = vadd.f32 %v258, 1e-12
        %v260 = vrsqrt.pop %v259
        %v261 = vmul.f32 %v260, %v259
        %v262 = vmul.f32 %v261, %v260
        %v263 = vmul.f32 0.5, %v262
        %v264 = vsub.f32 1.5, %v263
        %v265 = vmul.f32 %v260, %v264
        %vm266 = vweird.f32 %v259
        %vm267 = vweird.f32 %v260
        %vm268 = vmor %vm266, %vm267
        %v269 = vsel %vm268, %v260, %v265
        %v270 = vmul.f32 %v239, %v269
        %v271 = vmul.f32 %v240, %v269
        %v272 = vmul.f32 %v241, %v269
        %v273 = vmul.f32 %v242, %v269
        %v274 = vmul.f32 %v243, %v269
        %v275 = vmul.f32 %v244, %v269
        %v276 = vld [vmem:[#allocation5] sm:$0x3f]
        %v278 = vperm.slane %v276, 0
        %v279 = vperm.slane %v276, 1
        %v280 = vperm.slane %v276, 2
        %v281 = vperm.slane %v276, 3
        %v282 = vperm.slane %v276, 4
        %v283 = vperm.slane %v276, 5
        %v290 = vmul.f32 %v270, %v278
        %v291 = vmul.f32 %v271, %v279
        %v292 = vmul.f32 %v272, %v280
        %v293 = vmul.f32 %v273, %v281
        %v294 = vmul.f32 %v274, %v282
        %v295 = vmul.f32 %v275, %v283
        %v296 = vld [vmem:[#allocation7] sm:$0x3f]
        %v298 = vperm.slane %v296, 0
        %v299 = vperm.slane %v296, 1
        %v300 = vperm.slane %v296, 2
        %v301 = vperm.slane %v296, 3
        %v302 = vperm.slane %v296, 4
        %v303 = vperm.slane %v296, 5
        %v310 = vadd.f32 %v290, %v298
        %v311 = vadd.f32 %v291, %v299
        %v312 = vadd.f32 %v292, %v300
        %v313 = vadd.f32 %v293, %v301
        %v314 = vadd.f32 %v294, %v302
        %v315 = vadd.f32 %v295, %v303
        %v316 = vpack.c.bf16 %v311, %v310
        %v317 = vpack.c.bf16 %v313, %v312
        %v318 = vpack.c.bf16 %v315, %v314
        %319 = vst [vmem:[%s217] sm:$0xff] %v316
        %320 = vst [vmem:[%s217 + $0x8] sm:$0xff] %v317
        %321 = vst [vmem:[%s217 + $0x10] sm:$0xff] %v318
        %s322 = sand.u32 %s97, 1
        %s323 = scalar_lea.sflag [#allocation4], %s322
        %s324 = sand.u32 %s97, 1
        %s325 = smul.addr %s324, 24
        %s326 = scalar_lea.vmem [#allocation8], %s325
        // Predicated region
        $region45: #{tpu_custom_call.1} parent=31 // pred_check
          %p327 = pneg %p107
        $region46: #{tpu_custom_call.1} parent=31 // pred_check_branch
          %329 = sbr.rel (%p327) target = $region48
        $region47: #{tpu_custom_call.1} parent=31 // pred_region
          %331 = vsyncadd %s323, 0
          %s332 = smul.addr %s21, 6
          %s333 = smul.addr %s332, 4
          %s334 = scalar_lea.hbm %s3, %s333
          %s336 = sshll.u32 %s326, 4
          %s337 = int_to_ptr.vmem [resolvable:$true] %s336
          %s338 = sshll.u32 %s334, 4
          %s339 = int_to_ptr.hbm [resolvable:$true] %s338
          %341 = dma.vmem_to_hbm [thread:$0]  %s337, 384, %s339, %s323
        $region48: #{tpu_custom_call.1} parent=31 // pred_fallthru
          _
      $region32: #{tpu_custom_call.1} parent=5 // pred_fallthru
        _
      %p342 = scmp.le.s32.totalorder 2, %s16
      // Predicated region
      $region49: #{tpu_custom_call.1} parent=5 // pred_check
        %p343 = pneg %p342
      $region50: #{tpu_custom_call.1} parent=5 // pred_check_branch
        %345 = sbr.rel (%p343) target = $region52
      $region51: #{tpu_custom_call.1} parent=5 // pred_region
        %s346 = ssub.s32 %s16, 2
        // Predicated region
        $region53: #{tpu_custom_call.1} parent=51 // pred_check
          %p347 = pneg %p113
        $region54: #{tpu_custom_call.1} parent=51 // pred_check_branch
          %349 = sbr.rel (%p347) target = $region56
        $region55: #{tpu_custom_call.1} parent=51 // pred_region
          %s350 = sand.u32 %s98, 1
          %s351 = scalar_lea.sflag [#allocation4], %s350
          %s352 = sand.u32 %s98, 1
          %s353 = smul.addr %s352, 24
          %s354 = scalar_lea.vmem [#allocation8], %s353
          %356 = dma.done %s351, 384
        $region56: #{tpu_custom_call.1} parent=51 // pred_fallthru
          _
      $region52: #{tpu_custom_call.1} parent=5 // pred_fallthru
        _
    $region6: #{tpu_custom_call.1} parent=1 // loop_footer
      %s20 = sadd.s32 1, %s16
    $region7: #{tpu_custom_call.1} parent=1 // loop_footer_branch
      %15 = sbr.rel target = $region3
    $region8: #{tpu_custom_call.1} parent=1 // loop_exit
      _
    %357 = vsyncpa [#allocation3], 1
    %s358 = scalar_lea.sflag [#allocation3], 1
    %359 = vsyncpa %s358, 1
    %360 = vsyncpa [#allocation6], 1
    %361 = vsyncpa [#allocation4], 1
    %s362 = scalar_lea.sflag [#allocation4], 1
    %363 = vsyncpa %s362, 1

</llo_original>
